<compile_context>
chip_gen: v7x
topology: tpu7x:2x2x1
jax: 0.10.0
libtpu: 0.0.40
codegen_flags: <defaults>
</compile_context>

<pallas_src>
import functools

import jax
import jax.numpy as jnp
from jax.experimental import pallas as pl
from jax.experimental.pallas import tpu as pltpu

LANES = 128
VMEM_CAP = 32 * 1024 * 1024          # safe scoped-VMEM request on v5e/v6e/v7x


def _fused_centered_kernel(x_ref, o_ref, *, inv_n):
    """Small-input fast path: whole array in one VMEM block, one HBM read."""
    x = x_ref[...].astype(jnp.float32)
    mu = jnp.sum(x) * inv_n                       # f32 accumulation, true N
    o_ref[...] = (x - mu).astype(o_ref.dtype)


def _tile_sum_kernel(x_ref, psum_ref):
    """Pass 1: per-tile f32 partial sum, lane-resolved (1, 128).

    Pure map over tiles (no resident accumulator) -> grid axis can be
    "parallel" and megacore-shards on v7x.  Wrapper finishes the tiny
    cross-tile / cross-lane reduce.
    """
    psum_ref[...] = jnp.sum(x_ref[...].astype(jnp.float32),
                            axis=0, keepdims=True)


def _subtract_mean_kernel(mu_ref, x_ref, o_ref):
    """Pass 2: tiled elementwise x - mu; mu is a precomputed SMEM scalar."""
    mu = mu_ref[0, 0]
    o_ref[...] = (x_ref[...].astype(jnp.float32) - mu).astype(o_ref.dtype)


def centered_layer(x, *, tile_rows=2048, small_elems_threshold=1 << 20):
    """CenteredLayer.forward: x - x.mean() over all elements, any shape/dtype."""
    orig_shape = x.shape
    orig_dtype = x.dtype
    n = x.size
    inv_n = 1.0 / float(n)

    flat = x.reshape(-1)

    if n <= small_elems_threshold:
        # --- Fast path: one fused block, HBM traffic = read N + write N. ---
        chunk = 16 * LANES                        # full (sublane, lane) tiles
        padded = pl.cdiv(n, chunk) * chunk
        if padded != n:
            flat = jnp.pad(flat, (0, padded - n))  # zeros don't bias the sum
        x2d = flat.reshape(padded // LANES, LANES)

        out2d = pl.pallas_call(
            functools.partial(_fused_centered_kernel, inv_n=inv_n),
            out_shape=jax.ShapeDtypeStruct(x2d.shape, orig_dtype),
            in_specs=[pl.BlockSpec(memory_space=pltpu.MemorySpace.VMEM)],
            out_specs=pl.BlockSpec(memory_space=pltpu.MemorySpace.VMEM),
            compiler_params=pltpu.CompilerParams(vmem_limit_bytes=VMEM_CAP),
        )(x2d)
    else:
        # --- Tiled, pipelined two-pass path for large inputs. ---
        chunk = tile_rows * LANES                 # ~1 MiB f32 per tile
        padded = pl.cdiv(n, chunk) * chunk
        if padded != n:
            flat = jnp.pad(flat, (0, padded - n))
        rows = padded // LANES
        x2d = flat.reshape(rows, LANES)
        num_tiles = rows // tile_rows

        # Pass 1: per-tile partial sums ("parallel" -> both TCs on v7x).
        partials = pl.pallas_call(
            _tile_sum_kernel,
            out_shape=jax.ShapeDtypeStruct((num_tiles, 1, LANES), jnp.float32),
            grid=(num_tiles,),
            in_specs=[pl.BlockSpec((tile_rows, LANES), lambda i: (i, 0))],
            out_specs=pl.BlockSpec((None, 1, LANES), lambda i: (i, 0, 0)),
            compiler_params=pltpu.CompilerParams(
                dimension_semantics=("parallel",),
                vmem_limit_bytes=VMEM_CAP,
            ),
        )(x2d)

        # Tiny finishing reduce (num_tiles * 128 f32 values) + 1/N scale.
        mu = (jnp.sum(partials) * inv_n).reshape(1, 1).astype(jnp.float32)

        # Pass 2: elementwise subtract ("parallel" -> both TCs on v7x).
        out2d = pl.pallas_call(
            _subtract_mean_kernel,
            out_shape=jax.ShapeDtypeStruct(x2d.shape, orig_dtype),
            grid=(num_tiles,),
            in_specs=[
                pl.BlockSpec(memory_space=pltpu.MemorySpace.SMEM),  # (1,1) mu
                pl.BlockSpec((tile_rows, LANES), lambda i: (i, 0)),
            ],
            out_specs=pl.BlockSpec((tile_rows, LANES), lambda i: (i, 0)),
            compiler_params=pltpu.CompilerParams(
                dimension_semantics=("parallel",),
                vmem_limit_bytes=VMEM_CAP,
            ),
        )(mu, x2d)

    out_flat = out2d.reshape(-1)
    if out_flat.size != n:
        out_flat = out_flat[:n]                   # drop padding
    return out_flat.reshape(orig_shape)


if __name__ == "__main__":
    key = jax.random.PRNGKey(0)

    # Small NCHW input: batch=2, C=4, H=W=16 (fast path).
    x = jax.random.normal(key, (2, 4, 16, 16), dtype=jnp.float32)
    y = centered_layer(x)
    jax.block_until_ready(y)

    y_ref = x - jnp.mean(x)
    assert y.shape == x.shape and y.dtype == x.dtype
    assert jnp.allclose(y, y_ref, atol=1e-5, rtol=1e-5)
    assert abs(float(jnp.mean(y))) < 1e-5

    # Ragged size (not a multiple of 128) exercises pad + exact-mean + slice.
    x_odd = jax.random.normal(jax.random.PRNGKey(1), (3, 5, 7), dtype=jnp.float32)
    y_odd = centered_layer(x_odd)
    jax.block_until_ready(y_odd)
    assert jnp.allclose(y_odd, x_odd - jnp.mean(x_odd), atol=1e-5, rtol=1e-5)

    # Force the tiled two-pass path (tiny tiles so the demo stays small).
    y_tiled = centered_layer(x, tile_rows=8, small_elems_threshold=0)
    jax.block_until_ready(y_tiled)
    assert jnp.allclose(y_tiled, y_ref, atol=1e-5, rtol=1e-5)

    # bf16 input: f32 accumulation keeps the mean exact; output stays bf16.
    x_bf = x.astype(jnp.bfloat16)
    y_bf = centered_layer(x_bf)
    jax.block_until_ready(y_bf)
    ref_bf = (x_bf.astype(jnp.float32)
              - jnp.mean(x_bf.astype(jnp.float32))).astype(jnp.bfloat16)
    assert y_bf.dtype == jnp.bfloat16
    assert jnp.allclose(y_bf.astype(jnp.float32), ref_bf.astype(jnp.float32),
                        atol=2e-2, rtol=2e-2)

    print("KERNEL_OK")
</pallas_src>

<mosaic_0001>
module attributes {stable_mosaic.version = 11 : i64} {
  func.func @_fused_centered_kernel(%arg0: memref<16x128xf32, #tpu.memory_space<vmem>>, %arg1: memref<16x128xf32, #tpu.memory_space<vmem>>) attributes {dimension_semantics = [], scalar_prefetch = 0 : i64, scratch_operands = 0 : i64, tpu.core_type = #tpu.core_type<tc>} {
    %c0 = arith.constant 0 : index
    %c0_0 = arith.constant 0 : index
    %0 = vector.load %arg0[%c0, %c0_0] : memref<16x128xf32, #tpu.memory_space<vmem>>, vector<16x128xf32>
    %1 = vector.shape_cast %0 : vector<16x128xf32> to vector<1x16x128xf32>
    %cst = arith.constant dense<0.000000e+00> : vector<1xf32>
    %2 = vector.multi_reduction <add>, %1, %cst [1, 2] : vector<1x16x128xf32> to vector<1xf32>
    %3 = vector.shape_cast %2 : vector<1xf32> to vector<1x1x1xf32>
    %4 = vector.extract %3[0, 0, 0] : f32 from vector<1x1x1xf32>
    %cst_1 = arith.constant 4.8828125E-4 : f32
    %5 = arith.mulf %4, %cst_1 : f32
    %6 = vector.broadcast %5 : f32 to vector<16x128xf32>
    %7 = arith.subf %0, %6 : vector<16x128xf32>
    %c0_2 = arith.constant 0 : index
    %c0_3 = arith.constant 0 : index
    %8 = vector.load %arg1[%c0_2, %c0_3] : memref<16x128xf32, #tpu.memory_space<vmem>>, vector<16x128xf32>
    tpu.vector_store %arg1[%c0_2, %c0_3], %7 {strides = array<i32>} : memref<16x128xf32, #tpu.memory_space<vmem>>, vector<16x128xf32>,
    return
  }
}

</mosaic_0001>

<llo_original>
// kernel: tpu_custom_call.1
$region0: #{tpu_custom_call.1}
  #allocation0 [shape = 'u32[]', space=smem, size = 0x4, offset = 0x4, fixed_abs, tag = 'smem constant byte address 0x4 - core index']
  #allocation1 [shape = 'u32[144,128]{1,0:T(1,128)}', space=vmem, size = 0x12000, scoped, tag = 'internal scratch']
  %s0 = inlined_call_operand.hbm [shape: f32[16,128], index: 0, kind: input, shape index: {}]
  %s1 = inlined_call_operand.hbm [shape: f32[16,128], index: 1, kind: output, shape index: {}]
  %s2 = sld [smem:[#allocation0]]
  $region18: #{tpu_custom_call.1} parent=0
    _
  %s4 = ssub.s32 1, %s2
  %s5 = scalar_select 0, %s4, %s2
  $region1: #{tpu_custom_call.1} parent=0
    #allocation2 [shape = 'u8[8192]{0}', space=vmem, size = 0x2000, scoped, tag = 'input window, operand 0, single buffered']
    #allocation3 [shape = 's32[1]{0}', space=sflag, size = 0x4, scoped, tag = 'scoped memory for tpu_custom_call.1']
    #allocation4 [shape = 's32[1]{0}', space=sflag, size = 0x4, scoped, tag = 'scoped memory for tpu_custom_call.1']
    #allocation5 [shape = 'u8[8192]{0}', space=vmem, size = 0x2000, scoped, tag = 'output window, operand 0, single buffered']
    %6 = vsyncpa [#allocation3], 0
    %7 = vsyncpa [#allocation4], 0
    // Predicated region
    $region2: #{tpu_custom_call.1} parent=1 // pred_check
      _
    $region3: #{tpu_custom_call.1} parent=1 // pred_check_branch
      %9 = sbr.rel (0) target = $region5
    $region4: #{tpu_custom_call.1} parent=1 // pred_region
      %s11 = ssub.s32 256, 256
      %12 = vsyncadd [#allocation3], %s11
      %s13 = sshll.u32 [#allocation2], 4
      %s14 = int_to_ptr.vmem [resolvable:$true] %s13
      %19 = dma.hbm_to_vmem [thread:$0]  %s0, 256, %s14, [#allocation3], 128, 128, 8
    $region5: #{tpu_custom_call.1} parent=1 // pred_fallthru
      _
    // Predicated region
    $region6: #{tpu_custom_call.1} parent=1 // pred_check
      _
    $region7: #{tpu_custom_call.1} parent=1 // pred_check_branch
      %21 = sbr.rel (0) target = $region9
    $region8: #{tpu_custom_call.1} parent=1 // pred_region
      %22 = dma.done [#allocation3], 256
    $region9: #{tpu_custom_call.1} parent=1 // pred_fallthru
      _
    %v23 = vld [vmem:[#allocation2] sm:$0xff]
    %v24 = vld [vmem:[#allocation2 + $0x8] sm:$0xff]
    %v25 = vadd.f32 %v23, %v24
    %26 = vadd.xlane.f32.xlu0 %v25
    %v27 = vpop.xlane.xlu0 %26
    %v28 = vrot.slane %v27, 4
    %v29 = vadd.f32 %v27, %v28
    %v30 = vrot.slane %v29, 2
    %v31 = vadd.f32 %v29, %v30
    %v32 = vrot.slane %v31, 1
    %v33 = vadd.f32 %v31, %v32
    %s34 = vtos %v33
    %s35 = smul.f32 %s34, 0.00048828125
    %v36 = vstv %s35
    %v37 = vsub.f32 %v23, %v36
    %v38 = vsub.f32 %v24, %v36
    %39 = vst [vmem:[#allocation5] sm:$0xff] %v37
    %40 = vst [vmem:[#allocation5 + $0x8] sm:$0xff] %v38
    // Predicated region
    $region10: #{tpu_custom_call.1} parent=1 // pred_check
      _
    $region11: #{tpu_custom_call.1} parent=1 // pred_check_branch
      %42 = sbr.rel (0) target = $region13
    $region12: #{tpu_custom_call.1} parent=1 // pred_region
      %s44 = ssub.s32 256, 256
      %45 = vsyncadd [#allocation4], %s44
      %s46 = sshll.u32 [#allocation5], 4
      %s47 = int_to_ptr.vmem [resolvable:$true] %s46
      %52 = dma.vmem_to_hbm [thread:$0]  %s47, 256, %s1, [#allocation4], 128, 128, 8
    $region13: #{tpu_custom_call.1} parent=1 // pred_fallthru
      _
    // Predicated region
    $region14: #{tpu_custom_call.1} parent=1 // pred_check
      _
    $region15: #{tpu_custom_call.1} parent=1 // pred_check_branch
      %54 = sbr.rel (0) target = $region17
    $region16: #{tpu_custom_call.1} parent=1 // pred_region
      %55 = dma.done [#allocation4], 256
    $region17: #{tpu_custom_call.1} parent=1 // pred_fallthru
      _
    %56 = vsyncpa [#allocation3], 1
    %57 = vsyncpa [#allocation4], 1

</llo_original>
